<compile_context>
chip_gen: v7x
topology: tpu7x:2x2x1
jax: 0.10.0
libtpu: 0.0.40
codegen_flags: <defaults>
</compile_context>

<pallas_src>
import functools

import jax
import jax.numpy as jnp
from jax import lax
from jax.experimental import pallas as pl
from jax.experimental.pallas import tpu as pltpu

_LANE = 128
_MXU_BF16_MIN_M = 256   # below this the kernel is HBM-bound; keep exact f32 MXU inputs


def _cdiv(a, b):
    return -(-a // b)


def _round_up(v, m):
    return _cdiv(v, m) * m


def _vmem_plan():
    """Per-generation scoped-VMEM limit and tile budget (bytes)."""
    try:
        cap = int(pltpu.get_tpu_info().vmem_capacity_bytes)
    except Exception:
        cap = 64 << 20                                  # conservative: v7x per-TC VMEM
    limit = min((cap * 3) // 4, cap - (8 << 20))        # ~48 MiB v7x, ~96 MiB v5e/v6e
    budget = limit - (8 << 20)                          # headroom for compiler scratch
    return budget, limit


def _k_tiling(m, k, tile_budget):
    """Choose the K tile size and grid length under the VMEM budget."""
    fixed = 3 * m * m * 4            # resident gram/target (double-buffered) + f32 acc
    if fixed > tile_budget // 2:
        # TODO(synk): tile the gram output rows (M-tiles, 'parallel' axis) for huge M.
        raise NotImplementedError(f"StyleLoss Pallas kernel: M={m} too large for VMEM")
    per_col = 2 * m * 4              # double-buffered f32 feature columns
    tk_max = ((tile_budget - fixed) // per_col) // _LANE * _LANE
    tk_max = max(tk_max, _LANE)
    if k <= tk_max:
        return k, 1                  # single full-K block: no padding, no masking
    n_steps = _cdiv(_round_up(k, _LANE), tk_max)
    tk = _round_up(_cdiv(k, n_steps), _LANE)       # guaranteed <= tk_max
    return tk, _cdiv(k, tk)


# ----------------------------------------------------------------------------
# Kernels
# ----------------------------------------------------------------------------
def _accumulate_gram(feat_ref, acc_ref, *, k_total, tk, mxu_dtype):
    """acc += F_k @ F_k^T for the current K block (masking any OOB tail columns)."""
    f = feat_ref[...]
    if k_total % tk:
        # Partial last K block: Pallas' boundary padding is undefined data, so
        # zero the out-of-range columns. All-true (cheap VPU select) elsewhere.
        col = lax.broadcasted_iota(jnp.int32, f.shape, 1)
        f = jnp.where(col < (k_total - pl.program_id(0) * tk), f, jnp.zeros_like(f))
    if f.dtype != mxu_dtype:
        f = f.astype(mxu_dtype)
    # Contract axis 1 of both operands (F @ F^T) -> no explicit transpose pass.
    acc_ref[...] += lax.dot_general(
        f, f,
        dimension_numbers=(((1,), (1,)), ((), ())),
        preferred_element_type=jnp.float32,
    )


def _gram_kernel(feat_ref, g_ref, *, inv_total, k_total, tk, mxu_dtype):
    k = pl.program_id(0)

    @pl.when(k == 0)
    def _():
        g_ref[...] = jnp.zeros_like(g_ref)

    _accumulate_gram(feat_ref, g_ref, k_total=k_total, tk=tk, mxu_dtype=mxu_dtype)

    @pl.when(k == pl.num_programs(0) - 1)
    def _():
        g_ref[...] = g_ref[...] * inv_total


def _style_loss_kernel(feat_ref, tgt_ref, loss_ref, acc_ref, *,
                       inv_total, inv_mm, k_total, tk, mxu_dtype):
    k = pl.program_id(0)

    @pl.when(k == 0)
    def _():
        acc_ref[...] = jnp.zeros_like(acc_ref)

    _accumulate_gram(feat_ref, acc_ref, k_total=k_total, tk=tk, mxu_dtype=mxu_dtype)

    @pl.when(k == pl.num_programs(0) - 1)
    def _():
        diff = acc_ref[...] * inv_total - tgt_ref[...]
        loss_ref[0, 0] = jnp.sum(diff * diff) * inv_mm


# ----------------------------------------------------------------------------
# Wrappers
# ----------------------------------------------------------------------------
def gram_matrix(x):
    """PyTorch-equivalent gram_matrix: (a, b, c, d) -> (a*b, a*b) float32."""
    a, b, c, d = x.shape
    m, k = a * b, c * d
    inv_total = 1.0 / float(a * b * c * d)
    feats = x.reshape(m, k)                      # zero-copy reshape; no host padding
    budget, vmem_limit = _vmem_plan()
    tk, n_grid = _k_tiling(m, k, budget)
    mxu_dtype = jnp.bfloat16 if m >= _MXU_BF16_MIN_M else jnp.float32

    return pl.pallas_call(
        functools.partial(_gram_kernel, inv_total=inv_total, k_total=k, tk=tk,
                          mxu_dtype=mxu_dtype),
        out_shape=jax.ShapeDtypeStruct((m, m), jnp.float32),
        grid_spec=pltpu.PrefetchScalarGridSpec(
            num_scalar_prefetch=0,
            grid=(n_grid,),
            in_specs=[pl.BlockSpec((m, tk), lambda kk: (0, kk))],
            out_specs=pl.BlockSpec((m, m), lambda kk: (0, 0)),
        ),
        compiler_params=pltpu.CompilerParams(
            dimension_semantics=("arbitrary",),
            vmem_limit_bytes=vmem_limit,
        ),
    )(feats)


def style_loss_forward(x, target_gram):
    """Returns (input unchanged, scalar MSE loss between gram(x) and target_gram)."""
    a, b, c, d = x.shape
    m, k = a * b, c * d
    assert target_gram.shape == (m, m), "target / input layer shape mismatch"
    inv_total = 1.0 / float(a * b * c * d)
    inv_mm = 1.0 / float(m * m)
    feats = x.reshape(m, k)
    budget, vmem_limit = _vmem_plan()
    tk, n_grid = _k_tiling(m, k, budget)
    mxu_dtype = jnp.bfloat16 if m >= _MXU_BF16_MIN_M else jnp.float32

    loss = pl.pallas_call(
        functools.partial(_style_loss_kernel, inv_total=inv_total, inv_mm=inv_mm,
                          k_total=k, tk=tk, mxu_dtype=mxu_dtype),
        out_shape=jax.ShapeDtypeStruct((1, 1), jnp.float32),
        grid_spec=pltpu.PrefetchScalarGridSpec(
            num_scalar_prefetch=0,
            grid=(n_grid,),
            in_specs=[
                pl.BlockSpec((m, tk), lambda kk: (0, kk)),   # pipelined feature K tiles
                pl.BlockSpec((m, m), lambda kk: (0, 0)),     # resident target gram
            ],
            out_specs=pl.BlockSpec((1, 1), lambda kk: (0, 0),
                                   memory_space=pltpu.MemorySpace.SMEM),
            scratch_shapes=[pltpu.VMEM((m, m), jnp.float32)],
        ),
        compiler_params=pltpu.CompilerParams(
            dimension_semantics=("arbitrary",),
            vmem_limit_bytes=vmem_limit,
        ),
    )(feats, target_gram.astype(jnp.float32))
    return x, loss[0, 0]


class StyleLoss:
    """JAX/Pallas port of the PyTorch StyleLoss module."""

    def __init__(self, target_feature):
        # Target gram is a fixed buffer computed once at init (detached).
        self.target = gram_matrix(target_feature)
        self.loss = None

    def __call__(self, x):
        out, loss = style_loss_forward(x, self.target)
        self.loss = loss
        return out


# ----------------------------------------------------------------------------
# Main
# ----------------------------------------------------------------------------
if __name__ == "__main__":
    key = jax.random.PRNGKey(0)
    k_tgt, k_in = jax.random.split(key)

    # NCHW: batch=2, channels=4, spatial=16x16
    target_feature = jax.random.normal(k_tgt, (2, 4, 16, 16), dtype=jnp.float32)
    x = jax.random.normal(k_in, (2, 4, 16, 16), dtype=jnp.float32)

    module = StyleLoss(target_feature)
    out = module(x)
    jax.block_until_ready(out)
    jax.block_until_ready(module.loss)

    # Correctness check against a plain-JAX reference.
    def _gram_ref(v):
        a, b, c, d = v.shape
        f = v.reshape(a * b, c * d)
        return (f @ f.T) / (a * b * c * d)

    g_ref = _gram_ref(x)
    t_ref = _gram_ref(target_feature)
    loss_ref = jnp.mean((g_ref - t_ref) ** 2)

    assert out.shape == x.shape
    assert jnp.allclose(out, x)
    assert jnp.allclose(module.target, t_ref, atol=1e-5, rtol=1e-5)
    assert jnp.allclose(module.loss, loss_ref, atol=1e-5, rtol=1e-5)

    print("KERNEL_OK")
</pallas_src>

<mosaic_0001>
module attributes {stable_mosaic.version = 11 : i64} {
  func.func @_gram_kernel(%arg0: i32, %arg1: memref<8x256xf32, #tpu.memory_space<vmem>>, %arg2: memref<8x8xf32, #tpu.memory_space<vmem>>) attributes {dimension_semantics = [#tpu.dimension_semantics<arbitrary>], iteration_bounds = array<i64: 1>, scalar_prefetch = 0 : i64, scratch_operands = 0 : i64, tpu.core_type = #tpu.core_type<tc>, window_params = [{transform_indices = @transform_0, window_bounds = array<i64: 8, 256>}, {pipeline_mode = #tpu.pipeline_mode<synchronous>, transform_indices = @transform_1, window_bounds = array<i64: 8, 8>}]} {
    %c0_i32 = arith.constant 0 : i32
    %0 = arith.cmpi eq, %arg0, %c0_i32 : i32
    %1 = arith.extui %0 : i1 to i32
    %c0_i32_0 = arith.constant 0 : i32
    %2 = arith.cmpi ne, %1, %c0_i32_0 : i32
    scf.if %2 {
      %cst_8 = arith.constant 0.000000e+00 : f32
      %11 = vector.broadcast %cst_8 : f32 to vector<8x8xf32>
      %c0_9 = arith.constant 0 : index
      %c0_10 = arith.constant 0 : index
      %12 = vector.load %arg2[%c0_9, %c0_10] : memref<8x8xf32, #tpu.memory_space<vmem>>, vector<8x8xf32>
      tpu.vector_store %arg2[%c0_9, %c0_10], %11 {strides = array<i32>} : memref<8x8xf32, #tpu.memory_space<vmem>>, vector<8x8xf32>,
    } else {
    }
    %c0 = arith.constant 0 : index
    %c0_1 = arith.constant 0 : index
    %3 = vector.load %arg1[%c0, %c0_1] : memref<8x256xf32, #tpu.memory_space<vmem>>, vector<8x256xf32>
    %c0_2 = arith.constant 0 : index
    %c0_3 = arith.constant 0 : index
    %4 = vector.load %arg2[%c0_2, %c0_3] : memref<8x8xf32, #tpu.memory_space<vmem>>, vector<8x8xf32>
    %cst = arith.constant dense<0.000000e+00> : vector<8x8xf32>
    %5 = tpu.matmul %3, %3, %cst {dimension_numbers = #tpu.dot_dimension_numbers<[1], [1], [0], [0], [0, 0, 1, 0], [], []>} : vector<8x256xf32>, vector<8x256xf32>, vector<8x8xf32> -> vector<8x8xf32>
    %6 = arith.addf %4, %5 : vector<8x8xf32>
    %c0_4 = arith.constant 0 : index
    %c0_5 = arith.constant 0 : index
    %7 = vector.load %arg2[%c0_4, %c0_5] : memref<8x8xf32, #tpu.memory_space<vmem>>, vector<8x8xf32>
    tpu.vector_store %arg2[%c0_4, %c0_5], %6 {strides = array<i32>} : memref<8x8xf32, #tpu.memory_space<vmem>>, vector<8x8xf32>,
    %c0_i32_6 = arith.constant 0 : i32
    %8 = arith.cmpi eq, %arg0, %c0_i32_6 : i32
    %9 = arith.extui %8 : i1 to i32
    %c0_i32_7 = arith.constant 0 : i32
    %10 = arith.cmpi ne, %9, %c0_i32_7 : i32
    scf.if %10 {
      %c0_8 = arith.constant 0 : index
      %c0_9 = arith.constant 0 : index
      %11 = vector.load %arg2[%c0_8, %c0_9] : memref<8x8xf32, #tpu.memory_space<vmem>>, vector<8x8xf32>
      %cst_10 = arith.constant 4.8828125E-4 : f32
      %12 = vector.broadcast %cst_10 : f32 to vector<8x8xf32>
      %13 = arith.mulf %11, %12 : vector<8x8xf32>
      %c0_11 = arith.constant 0 : index
      %c0_12 = arith.constant 0 : index
      %14 = vector.load %arg2[%c0_11, %c0_12] : memref<8x8xf32, #tpu.memory_space<vmem>>, vector<8x8xf32>
      tpu.vector_store %arg2[%c0_11, %c0_12], %13 {strides = array<i32>} : memref<8x8xf32, #tpu.memory_space<vmem>>, vector<8x8xf32>,
    } else {
    }
    return
  }
  func.func @transform_0(%arg0: i32) -> (i32, i32) {
    %c0_i32 = arith.constant 0 : i32
    %c0_i32_0 = arith.constant 0 : i32
    return %c0_i32, %arg0 : i32, i32
  }
  func.func @transform_1(%arg0: i32) -> (i32, i32) {
    %c0_i32 = arith.constant 0 : i32
    %c0_i32_0 = arith.constant 0 : i32
    %c0_i32_1 = arith.constant 0 : i32
    return %c0_i32, %c0_i32_0 : i32, i32
  }
}

</mosaic_0001>

<llo_original>
// kernel: tpu_custom_call.1
$region0: #{tpu_custom_call.1}
  #allocation0 [shape = 'u32[]', space=smem, size = 0x4, offset = 0x4, fixed_abs, tag = 'smem constant byte address 0x4 - core index']
  #allocation1 [shape = 'u32[144,128]{1,0:T(1,128)}', space=vmem, size = 0x12000, scoped, tag = 'internal scratch']
  %s0 = inlined_call_operand.hbm [shape: f32[8,256], index: 0, kind: input, shape index: {}]
  %s1 = inlined_call_operand.hbm [shape: f32[8,8], index: 1, kind: output, shape index: {}]
  %s2 = sld [smem:[#allocation0]]
  $region26: #{tpu_custom_call.1} parent=0
    _
  %s4 = ssub.s32 1, %s2
  %s5 = scalar_select 0, %s4, %s2
  $region1: #{tpu_custom_call.1} parent=0
    #allocation2 [shape = 'u8[8192]{0}', space=vmem, size = 0x2000, scoped, tag = 'input window, operand 0, single buffered']
    #allocation3 [shape = 's32[1]{0}', space=sflag, size = 0x4, scoped, tag = 'scoped memory for tpu_custom_call.1']
    #allocation4 [shape = 's32[1]{0}', space=sflag, size = 0x4, scoped, tag = 'scoped memory for tpu_custom_call.1']
    #allocation5 [shape = 'u8[4096]{0}', space=vmem, size = 0x1000, scoped, tag = 'output window, operand 0, single buffered']
    %6 = vsyncpa [#allocation3], 0
    %7 = vsyncpa [#allocation4], 0
    // Predicated region
    $region2: #{tpu_custom_call.1} parent=1 // pred_check
      _
    $region3: #{tpu_custom_call.1} parent=1 // pred_check_branch
      %9 = sbr.rel (0) target = $region5
    $region4: #{tpu_custom_call.1} parent=1 // pred_region
      %s11 = ssub.s32 256, 256
      %12 = vsyncadd [#allocation3], %s11
      %s14 = sshll.u32 [#allocation2], 4
      %s15 = int_to_ptr.vmem [resolvable:$true] %s14
      %17 = dma.hbm_to_vmem [thread:$0]  %s0, 256, %s15, [#allocation3]
    $region5: #{tpu_custom_call.1} parent=1 // pred_fallthru
      _
    // Predicated region
    $region6: #{tpu_custom_call.1} parent=1 // pred_check
      _
    $region7: #{tpu_custom_call.1} parent=1 // pred_check_branch
      %19 = sbr.rel (0) target = $region9
    $region8: #{tpu_custom_call.1} parent=1 // pred_region
      %20 = dma.done [#allocation3], 256
    $region9: #{tpu_custom_call.1} parent=1 // pred_fallthru
      _
    %p21 = scmp.eq.s32.totalorder 0, 0
    // Predicated region
    $region10: #{tpu_custom_call.1} parent=1 // pred_check
      %p22 = pneg %p21
    $region11: #{tpu_custom_call.1} parent=1 // pred_check_branch
      %24 = sbr.rel (%p22) target = $region13
    $region12: #{tpu_custom_call.1} parent=1 // pred_region
      %vm25 = vcmask 64512
      %26 = vst.msk [vmem:[#allocation5] sm:$0xff] %vm25, 0.0
    $region13: #{tpu_custom_call.1} parent=1 // pred_fallthru
      _
    %v27 = vld [vmem:[#allocation2] sm:$0xff]
    %v28 = vld [vmem:[#allocation2 + $0x8] sm:$0xff]
    %v29 = vld [vmem:[#allocation5] sm:$0xff]
    %30 = vmatprep.subr.mxu0 %v28
    %31 = vmatpush1.xpose.msra.mxu0 %v27
    %32 = vmatprep.subr.mxu0 0.0
    %33 = vmatpush1.xpose.msra.mxu0 0.0
    %34 = vmatprep.subr.mxu0 0.0
    %35 = vmatpush1.xpose.msra.mxu0 0.0
    %36 = vmatprep.subr.mxu0 0.0
    %37 = vmatpush1.xpose.msra.mxu0 0.0
    %38 = vmatprep.subr.mxu0 0.0
    %39 = vmatpush1.xpose.msra.mxu0 0.0
    %40 = vmatprep.subr.mxu0 0.0
    %41 = vmatpush1.xpose.msra.mxu0 0.0
    %42 = vmatprep.subr.mxu0 0.0
    %43 = vmatpush1.xpose.msra.mxu0 0.0
    %44 = vmatprep.subr.mxu0 0.0
    %45 = vmatpush1.xpose.msra.mxu0 0.0
    %46 = vmatprep.subr.mxu0 0.0
    %47 = vmatpush1.xpose.msra.mxu0 0.0
    %48 = vmatprep.subr.mxu0 0.0
    %49 = vmatpush1.xpose.msra.mxu0 0.0
    %50 = vmatprep.subr.mxu0 0.0
    %51 = vmatpush1.xpose.msra.mxu0 0.0
    %52 = vmatprep.subr.mxu0 0.0
    %53 = vmatpush1.xpose.msra.mxu0 0.0
    %54 = vmatprep.subr.mxu0 0.0
    %55 = vmatpush1.xpose.msra.mxu0 0.0
    %56 = vmatprep.subr.mxu0 0.0
    %57 = vmatpush1.xpose.msra.mxu0 0.0
    %58 = vmatprep.subr.mxu0 0.0
    %59 = vmatpush1.xpose.msra.mxu0 0.0
    %60 = vmatprep.subr.mxu0 0.0
    %61 = vmatpush1.xpose.msra.mxu0 0.0
    %62 = vmatprep.subr.mxu0 0.0
    %63 = vmatpush1.xpose.msra.mxu0 0.0
    %64 = vmatprep.subr.mxu0 0.0
    %65 = vmatpush1.xpose.msra.mxu0 0.0
    %66 = vmatprep.subr.mxu0 0.0
    %67 = vmatpush1.xpose.msra.mxu0 0.0
    %68 = vmatprep.subr.mxu0 0.0
    %69 = vmatpush1.xpose.msra.mxu0 0.0
    %70 = vmatprep.subr.mxu0 0.0
    %71 = vmatpush1.xpose.msra.mxu0 0.0
    %72 = vmatprep.subr.mxu0 0.0
    %73 = vmatpush1.xpose.msra.mxu0 0.0
    %74 = vmatprep.subr.mxu0 0.0
    %75 = vmatpush1.xpose.msra.mxu0 0.0
    %76 = vmatprep.subr.mxu0 0.0
    %77 = vmatpush1.xpose.msra.mxu0 0.0
    %78 = vmatprep.subr.mxu0 0.0
    %79 = vmatpush1.xpose.msra.mxu0 0.0
    %80 = vmatprep.subr.mxu0 0.0
    %81 = vmatpush1.xpose.msra.mxu0 0.0
    %82 = vmatprep.subr.mxu0 0.0
    %83 = vmatpush1.xpose.msra.mxu0 0.0
    %84 = vmatprep.subr.mxu0 0.0
    %85 = vmatpush1.xpose.msra.mxu0 0.0
    %86 = vmatprep.subr.mxu0 0.0
    %87 = vmatpush1.xpose.msra.mxu0 0.0
    %88 = vmatprep.subr.mxu0 0.0
    %89 = vmatpush1.xpose.msra.mxu0 0.0
    %90 = vmatprep.subr.mxu0 0.0
    %91 = vmatpush1.xpose.msra.mxu0 0.0
    %92 = vmatprep.subr.mxu0 0.0
    %93 = vmatpush1.xpose.msra.mxu0 0.0
    %94 = vmatprep.mubr.f32.mxu0 %v28
    %95 = vmatmul.mubr.f32.gmra.mrb[0].mxu0 %v27
    %v96 = vpop.f32.mrb[0].mxu0
    %v97 = vadd.f32 0.0, %v96
    %v98 = vpop.f32.mrb[0].mxu0
    %99 = vdwg.mxu0
    %v100 = vadd.f32 %v29, %v97
    %vm101 = vcmask 64512
    %102 = vst.msk [vmem:[#allocation5] sm:$0xff] %vm101, %v100
    // Predicated region
    $region14: #{tpu_custom_call.1} parent=1 // pred_check
      %p103 = pneg %p21
    $region15: #{tpu_custom_call.1} parent=1 // pred_check_branch
      %105 = sbr.rel (%p103) target = $region17
    $region16: #{tpu_custom_call.1} parent=1 // pred_region
      %v106 = vld [vmem:[#allocation5] sm:$0xff]
      %v107 = vmul.f32 %v106, 0.00048828125
      %108 = vst.msk [vmem:[#allocation5] sm:$0xff] %vm101, %v107
    $region17: #{tpu_custom_call.1} parent=1 // pred_fallthru
      _
    // Predicated region
    $region18: #{tpu_custom_call.1} parent=1 // pred_check
      _
    $region19: #{tpu_custom_call.1} parent=1 // pred_check_branch
      %110 = sbr.rel (0) target = $region21
    $region20: #{tpu_custom_call.1} parent=1 // pred_region
      %s112 = ssub.s32 128, 128
      %113 = vsyncadd [#allocation4], %s112
      %s115 = sshll.u32 [#allocation5], 4
      %s116 = int_to_ptr.vmem [resolvable:$true] %s115
      %118 = dma.vmem_to_hbm [thread:$0]  %s116, 128, %s1, [#allocation4]
    $region21: #{tpu_custom_call.1} parent=1 // pred_fallthru
      _
    // Predicated region
    $region22: #{tpu_custom_call.1} parent=1 // pred_check
      _
    $region23: #{tpu_custom_call.1} parent=1 // pred_check_branch
      %120 = sbr.rel (0) target = $region25
    $region24: #{tpu_custom_call.1} parent=1 // pred_region
      %121 = dma.done [#allocation4], 128
    $region25: #{tpu_custom_call.1} parent=1 // pred_fallthru
      _
    %122 = vsyncpa [#allocation3], 1
    %123 = vsyncpa [#allocation4], 1

</llo_original>
